<compile_context>
chip_gen: v7x
topology: tpu7x:2x2x1
jax: 0.10.0
libtpu: 0.0.40
codegen_flags: <defaults>
</compile_context>

<pallas_src>
import numpy as np
import jax
import jax.numpy as jnp
from jax import lax
from jax.experimental import pallas as pl
from jax.experimental.pallas import tpu as pltpu

NDEG = 6        # degree_list = range(6)
BOND_F = 6      # bond feature width
DPAD = 64       # padded activation width (62 -> 64; conv hidden sizes are 64)


def _ceil_to(x, m):
    return ((x + m - 1) // m) * m


# ---------------------------------------------------------------------------
# Kernel 1: conv layer 0 (a0 -> a1) + softmax_0 fingerprint contribution.
# One grid step handles TM atom rows.
# ---------------------------------------------------------------------------
def conv_softmax_kernel(a_full_ref, A_ref, oh_ref, bias_ref,
                        Wp_ref, Wcat_ref, bo_ref,
                        a_next_ref, sm_ref):
    f32, bf16 = jnp.float32, jnp.bfloat16
    tm, hid = a_next_ref.shape

    row0 = pl.multiple_of(pl.program_id(0) * tm, tm)
    a_tile = a_full_ref[pl.ds(row0, tm), :]                         # [tm, 64] bf16

    # Neighbour aggregation: adjacency row-tile x full activation matrix (MXU).
    nbrs = jnp.dot(A_ref[...], a_full_ref[...], preferred_element_type=f32)

    # All 6 degree-specific neighbour transforms in ONE matmul (K=64, N=384),
    # then a pure-VPU one-hot gather over the 6 output blocks (f32 gating).
    Y = jnp.dot(nbrs.astype(bf16), Wcat_ref[...], preferred_element_type=f32)
    oh = oh_ref[...]
    deg_term = oh[:, 0:1] * Y[:, :hid]
    for d in range(1, NDEG):
        deg_term = deg_term + oh[:, d:d + 1] * Y[:, d * hid:(d + 1) * hid]

    # Packed [Wself | Wout] matmul: shared LHS a_l, single MXU pass (N = 64+h).
    z = jnp.dot(a_tile, Wp_ref[...], preferred_element_type=f32)
    a_next = jnp.maximum(z[:, :hid] + bias_ref[...] + deg_term, 0.0)
    a_next_ref[...] = a_next.astype(a_next_ref.dtype)

    logits = z[:, hid:] + bo_ref[...]
    logits = logits - jnp.max(logits, axis=-1, keepdims=True)
    e = jnp.exp(logits)
    sm_ref[...] = e * pl.reciprocal(jnp.sum(e, axis=-1, keepdims=True), approx=True)


# ---------------------------------------------------------------------------
# Kernel 2: conv layer 1 (a1 -> a2) + softmax_1 + softmax_2 + fused fragment
# pooling / to_dense_batch scatter (partial [h, B*M] slab per row tile).
# ---------------------------------------------------------------------------
def conv_pool_kernel(a_full_ref, A_ref, oh_ref, bias_ref, sm_prev_ref, pst_ref,
                     Wp_ref, Wcat_ref, Wo2_ref, bo1_ref, bo2_ref,
                     xt_ref):
    f32, bf16 = jnp.float32, jnp.bfloat16
    tm, hid = bias_ref.shape

    row0 = pl.multiple_of(pl.program_id(0) * tm, tm)
    a_tile = a_full_ref[pl.ds(row0, tm), :]                         # [tm, 64] bf16

    nbrs = jnp.dot(A_ref[...], a_full_ref[...], preferred_element_type=f32)
    Y = jnp.dot(nbrs.astype(bf16), Wcat_ref[...], preferred_element_type=f32)
    oh = oh_ref[...]
    deg_term = oh[:, 0:1] * Y[:, :hid]
    for d in range(1, NDEG):
        deg_term = deg_term + oh[:, d:d + 1] * Y[:, d * hid:(d + 1) * hid]

    z = jnp.dot(a_tile, Wp_ref[...], preferred_element_type=f32)    # [tm, 64+h]
    a2 = jnp.maximum(z[:, :hid] + bias_ref[...] + deg_term, 0.0)

    def softmax(x):
        x = x - jnp.max(x, axis=-1, keepdims=True)
        e = jnp.exp(x)
        return e * pl.reciprocal(jnp.sum(e, axis=-1, keepdims=True), approx=True)

    sm1 = softmax(z[:, hid:] + bo1_ref[...])
    sm2 = softmax(jnp.dot(a2.astype(bf16), Wo2_ref[...],
                          preferred_element_type=f32) + bo2_ref[...])
    sm_total = sm_prev_ref[...] + sm1 + sm2                         # [tm, h] f32

    # Fused fragment pooling + to_dense_batch: contraction over the atom axis,
    # transposed LHS fed directly to the MXU (no explicit XLU transpose).
    xt_ref[...] = lax.dot_general(
        sm_total.astype(bf16), pst_ref[...],
        dimension_numbers=(((0,), (0,)), ((), ())),
        preferred_element_type=f32)                                 # [h, B*M]


def fragment_neural_encoder(atom_feats, bond_feats, A, Binc, degs, S, P,
                            params, B, M, h):
    """atom_feats [N,62], bond_feats [E,6], A [N,N] 0/1, Binc [N,E] 0/1,
    degs [N] int, S [F,N] atom->fragment pooling (0/1), P [B*M,F] frag->slot (0/1)."""
    (Wo0, bo0, Ws0, b0, Wd0a, Wd0b,
     Wo1, bo1, Ws1, b1, Wd1a, Wd1b,
     Wo2, bo2) = [np.asarray(p, np.float32) for p in params]

    N, AF = atom_feats.shape
    BM = B * M
    HID0, HID1 = int(Ws0.shape[1]), int(Ws1.shape[1])
    assert HID0 == DPAD and HID1 == DPAD and AF <= DPAD

    # ---- row-tile / padding choice (grid over atom-row tiles) ----
    TM = _ceil_to(max(N, 8), 8) if N <= 256 else 256
    Np = _ceil_to(N, TM)
    nt = Np // TM

    degc = np.clip(np.asarray(degs, np.int64), 0, NDEG - 1)

    # ---- hoisted bond message (constant w.r.t. activations):
    #      bias_l = b_l + sum_d 1[deg=d] * ((Binc @ bond) @ Wdeg_b[l,d]) ----
    nbr_b = np.asarray(Binc, np.float32) @ np.asarray(bond_feats, np.float32)  # [N,6]

    def layer_bias(Wdb, b):
        per_deg = np.einsum('nb,dbh->ndh', nbr_b, Wdb)            # [N, 6, hid]
        bias = np.broadcast_to(b, (Np, b.shape[1])).astype(np.float32)
        bias = bias.copy()
        bias[:N] += per_deg[np.arange(N), degc]
        return bias

    bias0 = layer_bias(Wd0b, b0)
    bias1 = layer_bias(Wd1b, b1)

    # ---- padded structural operands ----
    a0 = np.zeros((Np, DPAD), np.float32); a0[:N, :AF] = atom_feats
    A_p = np.zeros((Np, Np), np.float32); A_p[:N, :N] = A
    oh = np.zeros((Np, 8), np.float32); oh[np.arange(N), degc] = 1.0
    PST = np.zeros((Np, BM), np.float32)
    PST[:N] = (np.asarray(P, np.float32) @ np.asarray(S, np.float32)).T
    m_flat = np.asarray(P, np.float32).sum(axis=-1)               # to_dense_batch mask

    def pad_rows(W, rows=DPAD):
        out = np.zeros((rows, W.shape[1]), np.float32); out[:W.shape[0]] = W
        return out

    # Packed weights: [Wself | Wout] (shared LHS) and the 6 degree weights side by side.
    Wp0 = np.concatenate([pad_rows(Ws0), pad_rows(Wo0)], axis=1)   # [64, 64+h]
    Wp1 = np.concatenate([Ws1, Wo1], axis=1)                       # [64, 64+h]
    Wcat0 = pad_rows(np.concatenate(list(Wd0a), axis=1))           # [64, 6*64]
    Wcat1 = pad_rows(np.concatenate(list(Wd1a), axis=1))           # [64, 6*64]

    f32, bf16 = jnp.float32, jnp.bfloat16

    # ---- generation-aware VMEM budget (~half of physical capacity) ----
    try:
        info = pltpu.get_tpu_info()
        vmem_cap = int(getattr(info, "vmem_capacity_bytes", 128 << 20))
    except Exception:
        vmem_cap = 128 << 20
    vmem_limit = max(16 << 20, vmem_cap // 2)

    cparams = pltpu.CompilerParams(dimension_semantics=("parallel",),
                                   vmem_limit_bytes=vmem_limit)

    def rows(c):
        return pl.BlockSpec((TM, c), lambda i: (i, 0))

    def full(r, c):
        return pl.BlockSpec((r, c), lambda i: (0, 0))

    a0_dev = jnp.asarray(a0, bf16)
    A_dev = jnp.asarray(A_p, bf16)
    oh_dev = jnp.asarray(oh)
    PST_dev = jnp.asarray(PST, bf16)

    # ---- call 1: conv layer 0 (a0 -> a1) + softmax_0 fingerprint term ----
    a1_dev, sm0_dev = pl.pallas_call(
        conv_softmax_kernel,
        grid=(nt,),
        in_specs=[full(Np, DPAD),             # a0 (full, RHS of A@a)
                  rows(Np),                   # adjacency row tile
                  rows(8),                    # degree one-hot
                  rows(DPAD),                 # b0 + bond bias
                  full(DPAD, DPAD + h),       # [Ws0 | Wo0]
                  full(DPAD, NDEG * DPAD),    # [Wdeg0_a[0] | ... | Wdeg0_a[5]]
                  full(1, h)],                # bo0
        out_specs=[rows(DPAD), rows(h)],
        out_shape=[jax.ShapeDtypeStruct((Np, DPAD), bf16),
                   jax.ShapeDtypeStruct((Np, h), f32)],
        compiler_params=cparams,
    )(a0_dev, A_dev, oh_dev, jnp.asarray(bias0),
      jnp.asarray(Wp0, bf16), jnp.asarray(Wcat0, bf16), jnp.asarray(bo0))

    # ---- call 2: conv layer 1 (a1 -> a2) + softmax_1/2 + fused pooling/scatter ----
    xt_parts = pl.pallas_call(
        conv_pool_kernel,
        grid=(nt,),
        in_specs=[full(Np, DPAD),             # a1 (full)
                  rows(Np),                   # adjacency row tile
                  rows(8),                    # degree one-hot
                  rows(DPAD),                 # b1 + bond bias
                  rows(h),                    # softmax_0 tile
                  rows(BM),                   # (P @ S)^T tile
                  full(DPAD, DPAD + h),       # [Ws1 | Wo1]
                  full(DPAD, NDEG * DPAD),    # [Wdeg1_a[d]]
                  full(DPAD, h),              # Wo2
                  full(1, h),                 # bo1
                  full(1, h)],                # bo2
        out_specs=pl.BlockSpec((None, h, BM), lambda i: (i, 0, 0)),
        out_shape=jax.ShapeDtypeStruct((nt, h, BM), f32),
        compiler_params=cparams,
    )(a1_dev, A_dev, oh_dev, jnp.asarray(bias1), sm0_dev, PST_dev,
      jnp.asarray(Wp1, bf16), jnp.asarray(Wcat1, bf16),
      jnp.asarray(pad_rows(Wo2), bf16), jnp.asarray(bo1), jnp.asarray(bo2))

    XT = jnp.sum(xt_parts, axis=0)            # [h, B*M]
    X = XT.T.reshape(B, M, h)
    m = jnp.asarray(m_flat).reshape(B, M)
    return X, m


def reference_forward(atom, bond, A, Binc, deg_oh, S, P, params, B, M, h):
    """Pure-numpy f32 reference of the canonical Duvenaud-NF forward + to_dense_batch."""
    (Wo0, bo0, Ws0, b0, Wd0a, Wd0b,
     Wo1, bo1, Ws1, b1, Wd1a, Wd1b,
     Wo2, bo2) = [np.asarray(p, np.float32) for p in params]

    def softmax(x):
        x = x - x.max(-1, keepdims=True)
        e = np.exp(x)
        return e / e.sum(-1, keepdims=True)

    nbr_b = Binc @ bond

    def conv(a, Ws, b, Wda, Wdb):
        nbr_a = A @ a
        acc = a @ Ws + b
        for d in range(NDEG):
            acc = acc + deg_oh[:, d:d + 1] * (nbr_a @ Wda[d] + nbr_b @ Wdb[d])
        return np.maximum(acc, 0.0)

    fp = S @ softmax(atom @ Wo0 + bo0)
    a1 = conv(atom, Ws0, b0, Wd0a, Wd0b)
    fp = fp + S @ softmax(a1 @ Wo1 + bo1)
    a2 = conv(a1, Ws1, b1, Wd1a, Wd1b)
    fp = fp + S @ softmax(a2 @ Wo2 + bo2)
    X = (P @ fp).reshape(B, M, h)
    m = P.sum(-1).reshape(B, M).astype(np.float32)
    return X, m


if __name__ == "__main__":
    key = jax.random.PRNGKey(0)
    H = 32                       # output_size h
    ATOM_F = 62
    HID = [64, 64]               # conv_layer_sizes

    # ---- deterministic synthetic fragment batch ('frg_batch') ----
    frag_sizes = [3, 2, 3, 2, 2]             # 5 fragments, 12 atoms
    frag_to_mol = np.array([0, 0, 0, 1, 1])  # batch_index_global
    N, F, B = sum(frag_sizes), len(frag_sizes), 2
    atom_to_frag = np.repeat(np.arange(F), frag_sizes)

    edges, start = [], 0
    for s in frag_sizes:                      # path graph inside each fragment
        edges += [(start + i, start + i + 1) for i in range(s - 1)]
        start += s
    E = len(edges)
    A = np.zeros((N, N), np.float32)
    Binc = np.zeros((N, E), np.float32)
    for e, (i, j) in enumerate(edges):
        A[i, j] = A[j, i] = 1.0
        Binc[i, e] = Binc[j, e] = 1.0
    degs = A.sum(1).astype(np.int32)
    deg_oh = np.eye(NDEG, dtype=np.float32)[np.clip(degs, 0, NDEG - 1)]
    S = np.zeros((F, N), np.float32)
    S[atom_to_frag, np.arange(N)] = 1.0

    counts = np.bincount(frag_to_mol, minlength=B)
    M = int(counts.max())
    pos = np.concatenate([np.arange(c) for c in counts])
    P = np.zeros((B * M, F), np.float32)
    P[frag_to_mol * M + pos, np.arange(F)] = 1.0

    keys = jax.random.split(key, 16)
    atom_feats = np.asarray(jax.random.normal(keys[0], (N, ATOM_F), jnp.float32))
    bond_feats = np.asarray(jax.random.normal(keys[1], (E, BOND_F), jnp.float32))

    def w(k, shape, scale=0.1):
        return np.asarray(scale * jax.random.normal(k, shape, jnp.float32))

    params = [
        w(keys[2], (ATOM_F, H)),             w(keys[3], (1, H)),                   # Wout0, bout0
        w(keys[4], (ATOM_F, HID[0])),        w(keys[5], (1, HID[0])),              # Wself0, b0
        w(keys[6], (NDEG, ATOM_F, HID[0])),  w(keys[7], (NDEG, BOND_F, HID[0])),   # Wdeg0 (atom|bond)
        w(keys[8], (HID[0], H)),             w(keys[9], (1, H)),                   # Wout1, bout1
        w(keys[10], (HID[0], HID[1])),       w(keys[11], (1, HID[1])),             # Wself1, b1
        w(keys[12], (NDEG, HID[0], HID[1])), w(keys[13], (NDEG, BOND_F, HID[1])),  # Wdeg1
        w(keys[14], (HID[1], H)),            w(keys[15], (1, H)),                  # Wout2, bout2
    ]

    X, m = fragment_neural_encoder(atom_feats, bond_feats, A, Binc, degs, S, P,
                                   params, B, M, H)
    jax.block_until_ready((X, m))

    # Shape / dtype / mask checks + loose numeric parity vs f32 reference
    # (bf16 matmul operands + approx reciprocal in softmax => small drift).
    X_ref, m_ref = reference_forward(atom_feats, bond_feats, A, Binc, deg_oh,
                                     S, P, params, B, M, H)
    assert X.shape == (B, M, H) and X.dtype == jnp.float32
    assert m.shape == (B, M) and m.dtype == jnp.float32
    np.testing.assert_allclose(np.asarray(m), m_ref, rtol=0, atol=0)
    np.testing.assert_allclose(np.asarray(X), X_ref, rtol=5e-2, atol=5e-2)
    assert bool(m[1, M - 1] == 0.0) and bool(m[0, 0] == 1.0)
    print("KERNEL_OK")
</pallas_src>

<mosaic_0001>
module attributes {stable_mosaic.version = 11 : i64} {
  func.func @conv_softmax_kernel(%arg0: i32, %arg1: memref<16x64xbf16, #tpu.memory_space<vmem>>, %arg2: memref<16x16xbf16, #tpu.memory_space<vmem>>, %arg3: memref<16x8xf32, #tpu.memory_space<vmem>>, %arg4: memref<16x64xf32, #tpu.memory_space<vmem>>, %arg5: memref<64x96xbf16, #tpu.memory_space<vmem>>, %arg6: memref<64x384xbf16, #tpu.memory_space<vmem>>, %arg7: memref<1x32xf32, #tpu.memory_space<vmem>>, %arg8: memref<16x64xbf16, #tpu.memory_space<vmem>>, %arg9: memref<16x32xf32, #tpu.memory_space<vmem>>) attributes {dimension_semantics = [#tpu.dimension_semantics<parallel>], iteration_bounds = array<i64: 1>, scalar_prefetch = 0 : i64, scratch_operands = 0 : i64, tpu.core_type = #tpu.core_type<tc>, window_params = [{pipeline_mode = #tpu.pipeline_mode<synchronous>, transform_indices = @transform_0, window_bounds = array<i64: 16, 64>}, {transform_indices = @transform_1, window_bounds = array<i64: 16, 16>}, {transform_indices = @transform_2, window_bounds = array<i64: 16, 8>}, {transform_indices = @transform_3, window_bounds = array<i64: 16, 64>}, {pipeline_mode = #tpu.pipeline_mode<synchronous>, transform_indices = @transform_4, window_bounds = array<i64: 64, 96>}, {pipeline_mode = #tpu.pipeline_mode<synchronous>, transform_indices = @transform_5, window_bounds = array<i64: 64, 384>}, {pipeline_mode = #tpu.pipeline_mode<synchronous>, transform_indices = @transform_6, window_bounds = array<i64: 1, 32>}, {transform_indices = @transform_7, window_bounds = array<i64: 16, 64>}, {transform_indices = @transform_8, window_bounds = array<i64: 16, 32>}]} {
    %c16_i32 = arith.constant 16 : i32
    %0 = arith.muli %arg0, %c16_i32 : i32
    %1 = tpu.assume_multiple %0, 16 : i32
    %2 = arith.index_cast %1 : i32 to index
    %c0 = arith.constant 0 : index
    %3 = vector.load %arg1[%2, %c0] : memref<16x64xbf16, #tpu.memory_space<vmem>>, vector<16x64xbf16>
    %c0_0 = arith.constant 0 : index
    %c0_1 = arith.constant 0 : index
    %4 = vector.load %arg2[%c0_0, %c0_1] : memref<16x16xbf16, #tpu.memory_space<vmem>>, vector<16x16xbf16>
    %c0_2 = arith.constant 0 : index
    %c0_3 = arith.constant 0 : index
    %5 = vector.load %arg1[%c0_2, %c0_3] : memref<16x64xbf16, #tpu.memory_space<vmem>>, vector<16x64xbf16>
    %cst = arith.constant dense<0.000000e+00> : vector<16x64xf32>
    %6 = tpu.matmul %4, %5, %cst {dimension_numbers = #tpu.dot_dimension_numbers<[1], [0], [0], [1], [0, 0, 1, 1], [], []>} : vector<16x16xbf16>, vector<16x64xbf16>, vector<16x64xf32> -> vector<16x64xf32>
    %7 = arith.truncf %6 : vector<16x64xf32> to vector<16x64xbf16>
    %c0_4 = arith.constant 0 : index
    %c0_5 = arith.constant 0 : index
    %8 = vector.load %arg6[%c0_4, %c0_5] : memref<64x384xbf16, #tpu.memory_space<vmem>>, vector<64x384xbf16>
    %cst_6 = arith.constant dense<0.000000e+00> : vector<16x384xf32>
    %9 = tpu.matmul %7, %8, %cst_6 {dimension_numbers = #tpu.dot_dimension_numbers<[1], [0], [0], [1], [0, 0, 1, 1], [], []>} : vector<16x64xbf16>, vector<64x384xbf16>, vector<16x384xf32> -> vector<16x384xf32>
    %c0_7 = arith.constant 0 : index
    %c0_8 = arith.constant 0 : index
    %10 = vector.load %arg3[%c0_7, %c0_8] : memref<16x8xf32, #tpu.memory_space<vmem>>, vector<16x8xf32>
    %11 = vector.extract_strided_slice %10 {offsets = [0, 0], sizes = [16, 1], strides = [1, 1]} : vector<16x8xf32> to vector<16x1xf32>
    %12 = vector.extract_strided_slice %9 {offsets = [0, 0], sizes = [16, 64], strides = [1, 1]} : vector<16x384xf32> to vector<16x64xf32>
    %13 = vector.broadcast %11 : vector<16x1xf32> to vector<16x64xf32>
    %14 = arith.mulf %13, %12 : vector<16x64xf32>
    %15 = vector.extract_strided_slice %10 {offsets = [0, 1], sizes = [16, 1], strides = [1, 1]} : vector<16x8xf32> to vector<16x1xf32>
    %16 = vector.extract_strided_slice %9 {offsets = [0, 64], sizes = [16, 64], strides = [1, 1]} : vector<16x384xf32> to vector<16x64xf32>
    %17 = vector.broadcast %15 : vector<16x1xf32> to vector<16x64xf32>
    %18 = arith.mulf %17, %16 : vector<16x64xf32>
    %19 = arith.addf %14, %18 : vector<16x64xf32>
    %20 = vector.extract_strided_slice %10 {offsets = [0, 2], sizes = [16, 1], strides = [1, 1]} : vector<16x8xf32> to vector<16x1xf32>
    %21 = vector.extract_strided_slice %9 {offsets = [0, 128], sizes = [16, 64], strides = [1, 1]} : vector<16x384xf32> to vector<16x64xf32>
    %22 = vector.broadcast %20 : vector<16x1xf32> to vector<16x64xf32>
    %23 = arith.mulf %22, %21 : vector<16x64xf32>
    %24 = arith.addf %19, %23 : vector<16x64xf32>
    %25 = vector.extract_strided_slice %10 {offsets = [0, 3], sizes = [16, 1], strides = [1, 1]} : vector<16x8xf32> to vector<16x1xf32>
    %26 = vector.extract_strided_slice %9 {offsets = [0, 192], sizes = [16, 64], strides = [1, 1]} : vector<16x384xf32> to vector<16x64xf32>
    %27 = vector.broadcast %25 : vector<16x1xf32> to vector<16x64xf32>
    %28 = arith.mulf %27, %26 : vector<16x64xf32>
    %29 = arith.addf %24, %28 : vector<16x64xf32>
    %30 = vector.extract_strided_slice %10 {offsets = [0, 4], sizes = [16, 1], strides = [1, 1]} : vector<16x8xf32> to vector<16x1xf32>
    %31 = vector.extract_strided_slice %9 {offsets = [0, 256], sizes = [16, 64], strides = [1, 1]} : vector<16x384xf32> to vector<16x64xf32>
    %32 = vector.broadcast %30 : vector<16x1xf32> to vector<16x64xf32>
    %33 = arith.mulf %32, %31 : vector<16x64xf32>
    %34 = arith.addf %29, %33 : vector<16x64xf32>
    %35 = vector.extract_strided_slice %10 {offsets = [0, 5], sizes = [16, 1], strides = [1, 1]} : vector<16x8xf32> to vector<16x1xf32>
    %36 = vector.extract_strided_slice %9 {offsets = [0, 320], sizes = [16, 64], strides = [1, 1]} : vector<16x384xf32> to vector<16x64xf32>
    %37 = vector.broadcast %35 : vector<16x1xf32> to vector<16x64xf32>
    %38 = arith.mulf %37, %36 : vector<16x64xf32>
    %39 = arith.addf %34, %38 : vector<16x64xf32>
    %c0_9 = arith.constant 0 : index
    %c0_10 = arith.constant 0 : index
    %40 = vector.load %arg5[%c0_9, %c0_10] : memref<64x96xbf16, #tpu.memory_space<vmem>>, vector<64x96xbf16>
    %cst_11 = arith.constant dense<0.000000e+00> : vector<16x96xf32>
    %41 = tpu.matmul %3, %40, %cst_11 {dimension_numbers = #tpu.dot_dimension_numbers<[1], [0], [0], [1], [0, 0, 1, 1], [], []>} : vector<16x64xbf16>, vector<64x96xbf16>, vector<16x96xf32> -> vector<16x96xf32>
    %42 = vector.extract_strided_slice %41 {offsets = [0, 0], sizes = [16, 64], strides = [1, 1]} : vector<16x96xf32> to vector<16x64xf32>
    %c0_12 = arith.constant 0 : index
    %c0_13 = arith.constant 0 : index
    %43 = vector.load %arg4[%c0_12, %c0_13] : memref<16x64xf32, #tpu.memory_space<vmem>>, vector<16x64xf32>
    %44 = arith.addf %42, %43 : vector<16x64xf32>
    %45 = arith.addf %44, %39 : vector<16x64xf32>
    %cst_14 = arith.constant 0.000000e+00 : f32
    %46 = vector.broadcast %cst_14 : f32 to vector<16x64xf32>
    %47 = arith.maximumf %45, %46 : vector<16x64xf32>
    %48 = arith.truncf %47 : vector<16x64xf32> to vector<16x64xbf16>
    %c0_15 = arith.constant 0 : index
    %c0_16 = arith.constant 0 : index
    %49 = vector.load %arg8[%c0_15, %c0_16] : memref<16x64xbf16, #tpu.memory_space<vmem>>, vector<16x64xbf16>
    tpu.vector_store %arg8[%c0_15, %c0_16], %48 {strides = array<i32>} : memref<16x64xbf16, #tpu.memory_space<vmem>>, vector<16x64xbf16>,
    %50 = vector.extract_strided_slice %41 {offsets = [0, 64], sizes = [16, 32], strides = [1, 1]} : vector<16x96xf32> to vector<16x32xf32>
    %c0_17 = arith.constant 0 : index
    %c0_18 = arith.constant 0 : index
    %51 = vector.load %arg7[%c0_17, %c0_18] : memref<1x32xf32, #tpu.memory_space<vmem>>, vector<1x32xf32>
    %52 = vector.broadcast %51 : vector<1x32xf32> to vector<16x32xf32>
    %53 = arith.addf %50, %52 : vector<16x32xf32>
    %cst_19 = arith.constant dense<0xFF800000> : vector<16xf32>
    %54 = vector.multi_reduction <maximumf>, %53, %cst_19 [1] : vector<16x32xf32> to vector<16xf32>
    %55 = vector.shape_cast %54 : vector<16xf32> to vector<16x1xf32>
    %56 = vector.broadcast %55 : vector<16x1xf32> to vector<16x32xf32>
    %57 = arith.subf %53, %56 : vector<16x32xf32>
    %58 = math.exp %57 : vector<16x32xf32>
    %cst_20 = arith.constant dense<0.000000e+00> : vector<16xf32>
    %59 = vector.multi_reduction <add>, %58, %cst_20 [1] : vector<16x32xf32> to vector<16xf32>
    %60 = vector.shape_cast %59 : vector<16xf32> to vector<16x1xf32>
    %61 = tpu.reciprocal %60 {approx = true} : vector<16x1xf32> -> vector<16x1xf32>
    %62 = vector.broadcast %61 : vector<16x1xf32> to vector<16x32xf32>
    %63 = arith.mulf %58, %62 : vector<16x32xf32>
    %c0_21 = arith.constant 0 : index
    %c0_22 = arith.constant 0 : index
    %64 = vector.load %arg9[%c0_21, %c0_22] : memref<16x32xf32, #tpu.memory_space<vmem>>, vector<16x32xf32>
    tpu.vector_store %arg9[%c0_21, %c0_22], %63 {strides = array<i32>} : memref<16x32xf32, #tpu.memory_space<vmem>>, vector<16x32xf32>,
    return
  }
  func.func @transform_0(%arg0: i32) -> (i32, i32) {
    %c0_i32 = arith.constant 0 : i32
    %c0_i32_0 = arith.constant 0 : i32
    %c0_i32_1 = arith.constant 0 : i32
    return %c0_i32, %c0_i32_0 : i32, i32
  }
  func.func @transform_1(%arg0: i32) -> (i32, i32) {
    %c0_i32 = arith.constant 0 : i32
    %c0_i32_0 = arith.constant 0 : i32
    return %arg0, %c0_i32 : i32, i32
  }
  func.func @transform_2(%arg0: i32) -> (i32, i32) {
    %c0_i32 = arith.constant 0 : i32
    %c0_i32_0 = arith.constant 0 : i32
    return %arg0, %c0_i32 : i32, i32
  }
  func.func @transform_3(%arg0: i32) -> (i32, i32) {
    %c0_i32 = arith.constant 0 : i32
    %c0_i32_0 = arith.constant 0 : i32
    return %arg0, %c0_i32 : i32, i32
  }
  func.func @transform_4(%arg0: i32) -> (i32, i32) {
    %c0_i32 = arith.constant 0 : i32
    %c0_i32_0 = arith.constant 0 : i32
    %c0_i32_1 = arith.constant 0 : i32
    return %c0_i32, %c0_i32_0 : i32, i32
  }
  func.func @transform_5(%arg0: i32) -> (i32, i32) {
    %c0_i32 = arith.constant 0 : i32
    %c0_i32_0 = arith.constant 0 : i32
    %c0_i32_1 = arith.constant 0 : i32
    return %c0_i32, %c0_i32_0 : i32, i32
  }
  func.func @transform_6(%arg0: i32) -> (i32, i32) {
    %c0_i32 = arith.constant 0 : i32
    %c0_i32_0 = arith.constant 0 : i32
    %c0_i32_1 = arith.constant 0 : i32
    return %c0_i32, %c0_i32_0 : i32, i32
  }
  func.func @transform_7(%arg0: i32) -> (i32, i32) {
    %c0_i32 = arith.constant 0 : i32
    %c0_i32_0 = arith.constant 0 : i32
    return %arg0, %c0_i32 : i32, i32
  }
  func.func @transform_8(%arg0: i32) -> (i32, i32) {
    %c0_i32 = arith.constant 0 : i32
    %c0_i32_0 = arith.constant 0 : i32
    return %arg0, %c0_i32 : i32, i32
  }
}

</mosaic_0001>

<llo_original>
// kernel: tpu_custom_call.1
$region0: #{tpu_custom_call.1}
  #allocation0 [shape = 'u32[]', space=smem, size = 0x4, offset = 0x4, fixed_abs, tag = 'smem constant byte address 0x4 - core index']
  #allocation1 [shape = 'u32[144,128]{1,0:T(1,128)}', space=vmem, size = 0x12000, scoped, tag = 'internal scratch']
  %s0 = inlined_call_operand.hbm [shape: bf16[16,64], index: 0, kind: input, shape index: {}]
  %s1 = inlined_call_operand.hbm [shape: bf16[16,16], index: 1, kind: input, shape index: {}]
  %s2 = inlined_call_operand.hbm [shape: f32[16,8], index: 2, kind: input, shape index: {}]
  %s3 = inlined_call_operand.hbm [shape: f32[16,64], index: 3, kind: input, shape index: {}]
  %s4 = inlined_call_operand.hbm [shape: bf16[64,96], index: 4, kind: input, shape index: {}]
  %s5 = inlined_call_operand.hbm [shape: bf16[64,384], index: 5, kind: input, shape index: {}]
  %s6 = inlined_call_operand.hbm [shape: f32[1,32], index: 6, kind: input, shape index: {}]
  %s7 = inlined_call_operand.hbm [shape: bf16[16,64], index: 7, kind: output, shape index: {0}]
  %s8 = inlined_call_operand.hbm [shape: f32[16,32], index: 8, kind: output, shape index: {1}]
  %9 = xla_tuple %s7, %s8
  %s10 = sld [smem:[#allocation0]]
  $region74: #{tpu_custom_call.1} parent=0
    _
  %s12 = ssub.s32 1, %s10
  %s13 = scalar_select 0, %s12, %s10
  $region1: #{tpu_custom_call.1} parent=0
    #allocation2 [shape = 'u8[4096]{0}', space=vmem, size = 0x1000, scoped, tag = 'input window, operand 0, single buffered']
    #allocation3 [shape = 's32[1]{0}', space=sflag, size = 0x4, scoped, tag = 'scoped memory for tpu_custom_call.1']
    #allocation4 [shape = 's32[1]{0}', space=sflag, size = 0x4, scoped, tag = 'scoped memory for tpu_custom_call.1']
    #allocation5 [shape = 'u8[4096]{0}', space=vmem, size = 0x1000, scoped, tag = 'input window, operand 1, single buffered']
    #allocation6 [shape = 's32[1]{0}', space=sflag, size = 0x4, scoped, tag = 'scoped memory for tpu_custom_call.1']
    #allocation7 [shape = 'u8[8192]{0}', space=vmem, size = 0x2000, scoped, tag = 'input window, operand 2, single buffered']
    #allocation8 [shape = 'u8[8192]{0}', space=vmem, size = 0x2000, scoped, tag = 'input window, operand 3, single buffered']
    #allocation9 [shape = 's32[1]{0}', space=sflag, size = 0x4, scoped, tag = 'scoped memory for tpu_custom_call.1']
    #allocation10 [shape = 'u8[16384]{0}', space=vmem, size = 0x4000, scoped, tag = 'input window, operand 4, single buffered']
    #allocation11 [shape = 'u8[49152]{0}', space=vmem, size = 0xc000, scoped, tag = 'input window, operand 5, single buffered']
    #allocation12 [shape = 's32[1]{0}', space=sflag, size = 0x4, scoped, tag = 'scoped memory for tpu_custom_call.1']
    #allocation13 [shape = 'u8[512]{0}', space=vmem, size = 0x400, scoped, tag = 'input window, operand 6, single buffered']
    #allocation14 [shape = 'u8[4096]{0}', space=vmem, size = 0x1000, scoped, tag = 'output window, operand 0, single buffered']
    #allocation15 [shape = 'u8[8192]{0}', space=vmem, size = 0x2000, scoped, tag = 'output window, operand 1, single buffered']
    #allocation16 [shape = 's32[1]{0}', space=sflag, size = 0x4, scoped, tag = 'scoped memory for tpu_custom_call.1']
    %14 = vsyncpa [#allocation3], 0
    %15 = vsyncpa [#allocation6], 0
    %16 = vsyncpa [#allocation9], 0
    %17 = vsyncpa [#allocation12], 0
    %18 = vsyncpa [#allocation4], 0
    %19 = vsyncpa [#allocation16], 0
    // Predicated region
    $region2: #{tpu_custom_call.1} parent=1 // pred_check
      _
    $region3: #{tpu_custom_call.1} parent=1 // pred_check_branch
      %21 = sbr.rel (0) target = $region5
    $region4: #{tpu_custom_call.1} parent=1 // pred_region
      %s23 = ssub.s32 128, 128
      %24 = vsyncadd [#allocation3], %s23
      %s25 = sshll.u32 [#allocation2], 4
      %s26 = int_to_ptr.vmem [resolvable:$true] %s25
      %31 = dma.hbm_to_vmem [thread:$0]  %s0, 128, %s26, [#allocation3], 64, 64, 4
    $region5: #{tpu_custom_call.1} parent=1 // pred_fallthru
      _
    // Predicated region
    $region6: #{tpu_custom_call.1} parent=1 // pred_check
      _
    $region7: #{tpu_custom_call.1} parent=1 // pred_check_branch
      %33 = sbr.rel (0) target = $region9
    $region8: #{tpu_custom_call.1} parent=1 // pred_region
      %s35 = ssub.s32 128, 128
      %36 = vsyncadd [#allocation6], %s35
      %s37 = sshll.u32 [#allocation5], 4
      %s38 = int_to_ptr.vmem [resolvable:$true] %s37
      %43 = dma.hbm_to_vmem [thread:$0]  %s1, 128, %s38, [#allocation6], 64, 64, 4
    $region9: #{tpu_custom_call.1} parent=1 // pred_fallthru
      _
    // Predicated region
    $region10: #{tpu_custom_call.1} parent=1 // pred_check
      _
    $region11: #{tpu_custom_call.1} parent=1 // pred_check_branch
      %45 = sbr.rel (0) target = $region13
    $region12: #{tpu_custom_call.1} parent=1 // pred_region
      %s47 = ssub.s32 256, 256
      %48 = vsyncadd [#allocation6], %s47
      %s49 = sshll.u32 [#allocation7], 4
      %s50 = int_to_ptr.vmem [resolvable:$true] %s49
      %55 = dma.hbm_to_vmem [thread:$0]  %s2, 256, %s50, [#allocation6], 128, 128, 8
    $region13: #{tpu_custom_call.1} parent=1 // pred_fallthru
      _
    // Predicated region
    $region14: #{tpu_custom_call.1} parent=1 // pred_check
      _
    $region15: #{tpu_custom_call.1} parent=1 // pred_check_branch
      %57 = sbr.rel (0) target = $region17
    $region16: #{tpu_custom_call.1} parent=1 // pred_region
      %s59 = ssub.s32 256, 256
      %60 = vsyncadd [#allocation9], %s59
      %s61 = sshll.u32 [#allocation8], 4
      %s62 = int_to_ptr.vmem [resolvable:$true] %s61
      %67 = dma.hbm_to_vmem [thread:$0]  %s3, 256, %s62, [#allocation9], 128, 128, 8
    $region17: #{tpu_custom_call.1} parent=1 // pred_fallthru
      _
    // Predicated region
    $region18: #{tpu_custom_call.1} parent=1 // pred_check
      _
    $region19: #{tpu_custom_call.1} parent=1 // pred_check_branch
      %69 = sbr.rel (0) target = $region21
    $region20: #{tpu_custom_call.1} parent=1 // pred_region
      %s71 = ssub.s32 512, 512
      %72 = vsyncadd [#allocation9], %s71
      %s73 = sshll.u32 [#allocation10], 4
      %s74 = int_to_ptr.vmem [resolvable:$true] %s73
      %79 = dma.hbm_to_vmem [thread:$0]  %s4, 512, %s74, [#allocation9], 64, 64, 4
    $region21: #{tpu_custom_call.1} parent=1 // pred_fallthru
      _
    // Predicated region
    $region22: #{tpu_custom_call.1} parent=1 // pred_check
      _
    $region23: #{tpu_custom_call.1} parent=1 // pred_check_branch
      %81 = sbr.rel (0) target = $region25
    $region24: #{tpu_custom_call.1} parent=1 // pred_region
      %s83 = ssub.s32 1536, 1536
      %84 = vsyncadd [#allocation12], %s83
      %s85 = sshll.u32 [#allocation11], 4
      %s86 = int_to_ptr.vmem [resolvable:$true] %s85
      %91 = dma.hbm_to_vmem [thread:$0]  %s5, 1536, %s86, [#allocation12], 192, 192, 12
    $region25: #{tpu_custom_call.1} parent=1 // pred_fallthru
      _
    // Predicated region
    $region26: #{tpu_custom_call.1} parent=1 // pred_check
      _
    $region27: #{tpu_custom_call.1} parent=1 // pred_check_branch
      %93 = sbr.rel (0) target = $region29
    $region28: #{tpu_custom_call.1} parent=1 // pred_region
      %s95 = ssub.s32 16, 16
      %96 = vsyncadd [#allocation12], %s95
      %s98 = sshll.u32 [#allocation13], 4
      %s99 = int_to_ptr.vmem [resolvable:$true] %s98
      %101 = dma.hbm_to_vmem [thread:$0]  %s6, 16, %s99, [#allocation12]
    $region29: #{tpu_custom_call.1} parent=1 // pred_fallthru
      _
    // Predicated region
    $region30: #{tpu_custom_call.1} parent=1 // pred_check
      _
    $region31: #{tpu_custom_call.1} parent=1 // pred_check_branch
      %103 = sbr.rel (0) target = $region33
    $region32: #{tpu_custom_call.1} parent=1 // pred_region
      %104 = dma.done [#allocation3], 128
    $region33: #{tpu_custom_call.1} parent=1 // pred_fallthru
      _
    // Predicated region
    $region34: #{tpu_custom_call.1} parent=1 // pred_check
      _
    $region35: #{tpu_custom_call.1} parent=1 // pred_check_branch
      %106 = sbr.rel (0) target = $region37
    $region36: #{tpu_custom_call.1} parent=1 // pred_region
      %107 = dma.done [#allocation6], 128
    $region37: #{tpu_custom_call.1} parent=1 // pred_fallthru
      _
    // Predicated region
    $region38: #{tpu_custom_call.1} parent=1 // pred_check
      _
    $region39: #{tpu_custom_call.1} parent=1 // pred_check_branch
      %109 = sbr.rel (0) target = $region41
    $region40: #{tpu_custom_call.1} parent=1 // pred_region
      %110 = dma.done [#allocation6], 256
    $region41: #{tpu_custom_call.1} parent=1 // pred_fallthru
      _
    // Predicated region
    $region42: #{tpu_custom_call.1} parent=1 // pred_check
      _
    $region43: #{tpu_custom_call.1} parent=1 // pred_check_branch
      %112 = sbr.rel (0) target = $region45
    $region44: #{tpu_custom_call.1} parent=1 // pred_region
      %113 = dma.done [#allocation9], 256
    $region45: #{tpu_custom_call.1} parent=1 // pred_fallthru
      _
    // Predicated region
    $region46: #{tpu_custom_call.1} parent=1 // pred_check
      _
    $region47: #{tpu_custom_call.1} parent=1 // pred_check_branch
      %115 = sbr.rel (0) target = $region49
    $region48: #{tpu_custom_call.1} parent=1 // pred_region
      %116 = dma.done [#allocation9], 512
    $region49: #{tpu_custom_call.1} parent=1 // pred_fallthru
      _
    // Predicated region
    $region50: #{tpu_custom_call.1} parent=1 // pred_check
      _
    $region51: #{tpu_custom_call.1} parent=1 // pred_check_branch
      %118 = sbr.rel (0) target = $region53
    $region52: #{tpu_custom_call.1} parent=1 // pred_region
      %119 = dma.done [#allocation12], 1536
    $region53: #{tpu_custom_call.1} parent=1 // pred_fallthru
      _
    // Predicated region
    $region54: #{tpu_custom_call.1} parent=1 // pred_check
      _
    $region55: #{tpu_custom_call.1} parent=1 // pred_check_branch
      %121 = sbr.rel (0) target = $region57
    $region56: #{tpu_custom_call.1} parent=1 // pred_region
      %122 = dma.done [#allocation12], 16
    $region57: #{tpu_custom_call.1} parent=1 // pred_fallthru
      _
    %s124 = smul.u32 0, 16
    %s125 = sshra.s32 %s124, 3
    %s126 = sand.u32 %s124, 7
    %s127 = smul.addr %s125, 4
    %s128 = scalar_lea.vmem [#allocation2], %s127
    %v129 = vld [vmem:[%s128] sm:$0xf]
    %v130 = vld [vmem:[%s128 + $0x4] sm:$0xf]
    %v131 = vld [vmem:[#allocation5] sm:$0xf]
    %v132 = vld [vmem:[#allocation5 + $0x4] sm:$0xf]
    %v133 = vld [vmem:[#allocation2] sm:$0xf]
    %v134 = vld [vmem:[#allocation2 + $0x4] sm:$0xf]
    %v137 = vunpack.c.l.b16 %v131
    %v138 = vunpack.c.l.b16 %v132
    %v139 = vpack.c.b16 %v138, %v137
    %v142 = vunpack.c.l.b16 %v133
    %v143 = vunpack.c.l.b16 %v134
    %v144 = vpack.c.b16 %v143, %v142
    %vm146 = vcmask 130048
    %v148 = vsel %vm146, %v139, 0
    %150 = vmatprep.subr.bf16.mxu0 0
    %151 = vmatpush1.bf16.msra.mxu0 %v144
    %152 = vmatprep.subr.bf16.mxu0 0
    %153 = vmatpush1.bf16.msra.mxu0 0
    %154 = vmatprep.subr.bf16.mxu0 0
    %155 = vmatpush1.bf16.msra.mxu0 0
    %156 = vmatprep.subr.bf16.mxu0 0
    %157 = vmatpush1.bf16.msra.mxu0 0
    %158 = vmatprep.subr.bf16.mxu0 0
    %159 = vmatpush1.bf16.msra.mxu0 0
    %160 = vmatprep.subr.bf16.mxu0 0
    %161 = vmatpush1.bf16.msra.mxu0 0
    %162 = vmatprep.subr.bf16.mxu0 0
    %163 = vmatpush1.bf16.msra.mxu0 0
    %164 = vmatprep.subr.bf16.mxu0 0
    %165 = vmatpush1.bf16.msra.mxu0 0
    %166 = vmatprep.subr.bf16.mxu0 0
    %167 = vmatpush1.bf16.msra.mxu0 0
    %168 = vmatprep.subr.bf16.mxu0 0
    %169 = vmatpush1.bf16.msra.mxu0 0
    %170 = vmatprep.subr.bf16.mxu0 0
    %171 = vmatpush1.bf16.msra.mxu0 0
    %172 = vmatprep.subr.bf16.mxu0 0
    %173 = vmatpush1.bf16.msra.mxu0 0
    %174 = vmatprep.subr.bf16.mxu0 0
    %175 = vmatpush1.bf16.msra.mxu0 0
    %176 = vmatprep.subr.bf16.mxu0 0
    %177 = vmatpush1.bf16.msra.mxu0 0
    %178 = vmatprep.subr.bf16.mxu0 0
    %179 = vmatpush1.bf16.msra.mxu0 0
    %180 = vmatprep.subr.bf16.mxu0 0
    %181 = vmatpush1.bf16.msra.mxu0 0
    %182 = vmatprep.mubr.bf16.mxu0 0
    %183 = vmatmul.mubr.bf16.gmra.mrb[0].mxu0 %v148
    %v184 = vpop.f32.mrb[0].mxu0
    %v185 = vadd.f32 0.0, %v184
    %v186 = vpop.f32.mrb[0].mxu0
    %v187 = vpop.f32.mrb[0].mxu0
    %v188 = vadd.f32 0.0, %v187
    %v189 = vpop.f32.mrb[0].mxu0
    %190 = vdwg.mxu0
    %v191 = vpack.c.bf16 %v188, %v185
    %v192 = vld [vmem:[#allocation11] sm:$0xff]
    %v193 = vld [vmem:[#allocation11 + $0x8] sm:$0xf]
    %v194 = vld [vmem:[#allocation11 + $0xc] sm:$0xff]
    %v195 = vld [vmem:[#allocation11 + $0x14] sm:$0xf]
    %v196 = vld [vmem:[#allocation11 + $0x18] sm:$0xff]
    %v197 = vld [vmem:[#allocation11 + $0x20] sm:$0xf]
    %v198 = vld [vmem:[#allocation11 + $0x24] sm:$0xff]
    %v199 = vld [vmem:[#allocation11 + $0x2c] sm:$0xf]
    %v200 = vld [vmem:[#allocation11 + $0x30] sm:$0xff]
    %v201 = vld [vmem:[#allocation11 + $0x38] sm:$0xf]
    %v202 = vld [vmem:[#allocation11 + $0x3c] sm:$0xff]
    %v203 = vld [vmem:[#allocation11 + $0x44] sm:$0xf]
    %v204 = vld [vmem:[#allocation11 + $0x48] sm:$0xff]
    %v205 = vld [vmem:[#allocation11 + $0x50] sm:$0xf]
    %v206 = vld [vmem:[#allocation11 + $0x54] sm:$0xff]
    %v207 = vld [vmem:[#allocation11 + $0x5c] sm:$0xf]
    %v224 = vunpack.c.l.b16 %v192
    %v225 = vunpack.c.h.b16 %v192
    %v226 = vunpack.c.l.b16 %v193
    %v227 = vunpack.c.l.b16 %v194
    %v228 = vunpack.c.h.b16 %v194
    %v229 = vunpack.c.l.b16 %v195
    %v230 = vunpack.c.l.b16 %v196
    %v231 = vunpack.c.h.b16 %v196
    %v232 = vunpack.c.l.b16 %v197
    %v233 = vunpack.c.l.b16 %v198
    %v234 = vunpack.c.h.b16 %v198
    %v235 = vunpack.c.l.b16 %v199
    %v236 = vunpack.c.l.b16 %v200
    %v237 = vunpack.c.h.b16 %v200
    %v238 = vunpack.c.l.b16 %v201
    %v239 = vunpack.c.l.b16 %v202
    %v240 = vunpack.c.h.b16 %v202
    %v241 = vunpack.c.l.b16 %v203
    %v242 = vunpack.c.l.b16 %v204
    %v243 = vunpack.c.h.b16 %v204
    %v244 = vunpack.c.l.b16 %v205
    %v245 = vunpack.c.l.b16 %v206
    %v246 = vunpack.c.h.b16 %v206
    %v247 = vunpack.c.l.b16 %v207
    %v248 = vpack.c.b16 %v227, %v224
    %v249 = vpack.c.b16 %v228, %v225
    %v250 = vpack.c.b16 %v229, %v226
    %v251 = vpack.c.b16 %v233, %v230
    %v252 = vpack.c.b16 %v234, %v231
    %v253 = vpack.c.b16 %v235, %v232
    %v254 = vpack.c.b16 %v239, %v236
    %v255 = vpack.c.b16 %v240, %v237
    %v256 = vpack.c.b16 %v241, %v238
    %v257 = vpack.c.b16 %v245, %v242
    %v258 = vpack.c.b16 %v246, %v243
    %v259 = vpack.c.b16 %v247, %v244
    %vm272 = vcmask 523264
    %v274 = vsel %vm272, %v191, 0
    %276 = vmatprep.subr.bf16.mxu0 %v249
    %277 = vmatpush1.bf16.msra.mxu0 %v248
    %278 = vmatprep.subr.bf16.mxu0 %v252
    %279 = vmatpush1.bf16.msra.mxu0 %v251
    %280 = vmatprep.subr.bf16.mxu0 %v255
    %281 = vmatpush1.bf16.msra.mxu0 %v254
    %282 = vmatprep.subr.bf16.mxu0 %v258
    %283 = vmatpush1.bf16.msra.mxu0 %v257
    %284 = vmatprep.subr.bf16.mxu0 0
    %285 = vmatpush1.bf16.msra.mxu0 0
    %286 = vmatprep.subr.bf16.mxu0 0
    %287 = vmatpush1.bf16.msra.mxu0 0
    %288 = vmatprep.subr.bf16.mxu0 0
    %289 = vmatpush1.bf16.msra.mxu0 0
    %290 = vmatprep.subr.bf16.mxu0 0
    %291 = vmatpush1.bf16.msra.mxu0 0
    %292 = vmatprep.subr.bf16.mxu0 0
    %293 = vmatpush1.bf16.msra.mxu0 0
    %294 = vmatprep.subr.bf16.mxu0 0
    %295 = vmatpush1.bf16.msra.mxu0 0
    %296 = vmatprep.subr.bf16.mxu0 0
    %297 = vmatpush1.bf16.msra.mxu0 0
    %298 = vmatprep.subr.bf16.mxu0 0
    %299 = vmatpush1.bf16.msra.mxu0 0
    %300 = vmatprep.subr.bf16.mxu0 0
    %301 = vmatpush1.bf16.msra.mxu0 0
    %302 = vmatprep.subr.bf16.mxu0 0
    %303 = vmatpush1.bf16.msra.mxu0 0
    %304 = vmatprep.subr.bf16.mxu0 0
    %305 = vmatpush1.bf16.msra.mxu0 0
    %306 = vmatprep.subr.bf16.mxu0 0
    %307 = vmatpush1.bf16.msra.mxu0 0
    %308 = vmatprep.mubr.bf16.mxu0 0
    %309 = vmatmul.mubr.bf16.gmra.mrb[0].mxu0 %v274
    %v310 = vpop.f32.mrb[0].mxu0
    %v311 = vadd.f32 0.0, %v310
    %v312 = vpop.f32.mrb[0].mxu0
    %v313 = vadd.f32 0.0, %v312
    %v314 = vpop.f32.mrb[0].mxu0
    %v315 = vadd.f32 0.0, %v314
    %v316 = vpop.f32.mrb[0].mxu0
    %v317 = vadd.f32 0.0, %v316
    %318 = vdwg.mxu0
    %319 = vmatprep.subr.bf16.mxu0 0
    %320 = vmatpush1.bf16.msra.mxu0 %v250
    %321 = vmatprep.subr.bf16.mxu0 0
    %322 = vmatpush1.bf16.msra.mxu0 %v253
    %323 = vmatprep.subr.bf16.mxu0 0
    %324 = vmatpush1.bf16.msra.mxu0 %v256
    %325 = vmatprep.subr.bf16.mxu0 0
    %326 = vmatpush1.bf16.msra.mxu0 %v259
    %327 = vmatprep.subr.bf16.mxu0 0
    %328 = vmatpush1.bf16.msra.mxu0 0
    %329 = vmatprep.subr.bf16.mxu0 0
    %330 = vmatpush1.bf16.msra.mxu0 0
    %331 = vmatprep.subr.bf16.mxu0 0
    %332 = vmatpush1.bf16.msra.mxu0 0
    %333 = vmatprep.subr.bf16.mxu0 0
    %334 = vmatpush1.bf16.msra.mxu0 0
    %335 = vmatprep.subr.bf16.mxu0 0
    %336 = vmatpush1.bf16.msra.mxu0 0
    %337 = vmatprep.subr.bf16.mxu0 0
    %338 = vmatpush1.bf16.msra.mxu0 0
    %339 = vmatprep.subr.bf16.mxu0 0
    %340 = vmatpush1.bf16.msra.mxu0 0
    %341 = vmatprep.subr.bf16.mxu0 0
    %342 = vmatpush1.bf16.msra.mxu0 0
    %343 = vmatprep.subr.bf16.mxu0 0
    %344 = vmatpush1.bf16.msra.mxu0 0
    %345 = vmatprep.subr.bf16.mxu0 0
    %346 = vmatpush1.bf16.msra.mxu0 0
    %347 = vmatprep.subr.bf16.mxu0 0
    %348 = vmatpush1.bf16.msra.mxu0 0
    %349 = vmatprep.subr.bf16.mxu0 0
    %350 = vmatpush1.bf16.msra.mxu0 0
    %351 = vmatprep.mubr.bf16.mxu0 0
    %352 = vmatmul.mubr.bf16.gmra.mrb[0].mxu0 %v274
    %v353 = vpop.f32.mrb[0].mxu0
    %v354 = vadd.f32 0.0, %v353
    %v355 = vpop.f32.mrb[0].mxu0
    %v356 = vpop.f32.mrb[0].mxu0
    %v357 = vadd.f32 0.0, %v356
    %v358 = vpop.f32.mrb[0].mxu0
    %359 = vdwg.mxu0
    %v360 = vld [vmem:[#allocation7] sm:$0xff]
    %v361 = vld [vmem:[#allocation7 + $0x8] sm:$0xff]
    %363 = vset.pattern.permute.xlu0 0
    %364 = vperm.xlu0 %363, %v360
    %v365 = vpop.permute.xlu0 %364
    %368 = vset.pattern.permute.xlu0 0
    %369 = vperm.xlu0 %368, %v361
    %v370 = vpop.permute.xlu0 %369
    %v372 = vmul.f32 %v365, %v311
    %v373 = vmul.f32 %v370, %v315
    %374 = vset.pattern.permute.xlu0 1
    %375 = vperm.xlu0 %374, %v360
    %v376 = vpop.permute.xlu0 %375
    %378 = vset.pattern.permute.xlu0 1
    %379 = vperm.xlu0 %378, %v361
    %v380 = vpop.permute.xlu0 %379
    %v382 = vmul.f32 %v376, %v311
    %v383 = vmul.f32 %v380, %v315
    %386 = vrot.lane.b32.xlu0 %v382, 64
    %v387 = vpop.permute.xlu0 %386
    %388 = vrot.lane.b32.xlu0 %v383, 64
    %v389 = vpop.permute.xlu0 %388
    %v392 = vadd.f32 %v372, %v387
    %v393 = vadd.f32 %v373, %v389
    %394 = vset.pattern.permute.xlu0 2
    %395 = vperm.xlu0 %394, %v360
    %v396 = vpop.permute.xlu0 %395
    %398 = vset.pattern.permute.xlu0 2
    %399 = vperm.xlu0 %398, %v361
    %v400 = vpop.permute.xlu0 %399
    %v402 = vmul.f32 %v396, %v313
    %v403 = vmul.f32 %v400, %v317
    %v404 = vadd.f32 %v392, %v402
    %v405 = vadd.f32 %v393, %v403
    %406 = vset.pattern.permute.xlu0 3
    %407 = vperm.xlu0 %406, %v360
    %v408 = vpop.permute.xlu0 %407
    %410 = vset.pattern.permute.xlu0 3
    %411 = vperm.xlu0 %410, %v361
    %v412 = vpop.permute.xlu0 %411
    %v414 = vmul.f32 %v408, %v313
    %v415 = vmul.f32 %v412, %v317
    %418 = vrot.lane.b32.xlu0 %v414, 64
    %v419 = vpop.permute.xlu0 %418
    %420 = vrot.lane.b32.xlu0 %v415, 64
    %v421 = vpop.permute.xlu0 %420
    %v424 = vadd.f32 %v404, %v419
    %v425 = vadd.f32 %v405, %v421
    %426 = vset.pattern.permute.xlu0 4
    %427 = vperm.xlu0 %426, %v360
    %v428 = vpop.permute.xlu0 %427
    %430 = vset.pattern.permute.xlu0 4
    %431 = vperm.xlu0 %430, %v361
    %v432 = vpop.permute.xlu0 %431
    %v434 = vmul.f32 %v428, %v354
    %v435 = vmul.f32 %v432, %v357
    %v436 = vadd.f32 %v424, %v434
    %v437 = vadd.f32 %v425, %v435
    %438 = vset.pattern.permute.xlu0 5
    %439 = vperm.xlu0 %438, %v360
    %v440 = vpop.permute.xlu0 %439
    %442 = vset.pattern.permute.xlu0 5
    %443 = vperm.xlu0 %442, %v361
    %v444 = vpop.permute.xlu0 %443
    %v446 = vmul.f32 %v440, %v354
    %v447 = vmul.f32 %v444, %v357
    %450 = vrot.lane.b32.xlu0 %v446, 64
    %v451 = vpop.permute.xlu0 %450
    %452 = vrot.lane.b32.xlu0 %v447, 64
    %v453 = vpop.permute.xlu0 %452
    %v456 = vadd.f32 %v436, %v451
    %v457 = vadd.f32 %v437, %v453
    %v458 = vld [vmem:[#allocation10] sm:$0xf]
    %v459 = vld [vmem:[#allocation10 + $0x4] sm:$0xf]
    %v460 = vld [vmem:[#allocation10 + $0x8] sm:$0xf]
    %v461 = vld [vmem:[#allocation10 + $0xc] sm:$0xf]
    %v462 = vld [vmem:[#allocation10 + $0x10] sm:$0xf]
    %v463 = vld [vmem:[#allocation10 + $0x14] sm:$0xf]
    %v464 = vld [vmem:[#allocation10 + $0x18] sm:$0xf]
    %v465 = vld [vmem:[#allocation10 + $0x1c] sm:$0xf]
    %v468 = vunpack.c.l.b16 %v129
    %v469 = vunpack.c.l.b16 %v130
    %v470 = vpack.c.b16 %v469, %v468
    %v479 = vunpack.c.l.b16 %v458
    %v480 = vunpack.c.l.b16 %v459
    %v481 = vunpack.c.l.b16 %v460
    %v482 = vunpack.c.l.b16 %v461
    %v483 = vunpack.c.l.b16 %v462
    %v484 = vunpack.c.l.b16 %v463
    %v485 = vunpack.c.l.b16 %v464
    %v486 = vunpack.c.l.b16 %v465
    %v487 = vpack.c.b16 %v480, %v479
    %v488 = vpack.c.b16 %v482, %v481
    %v489 = vpack.c.b16 %v484, %v483
    %v490 = vpack.c.b16 %v486, %v485
    %v496 = vsel %vm272, %v470, 0
    %498 = vmatprep.subr.bf16.mxu0 0
    %499 = vmatpush1.bf16.msra.mxu0 %v487
    %500 = vmatprep.subr.bf16.mxu0 0
    %501 = vmatpush1.bf16.msra.mxu0 %v488
    %502 = vmatprep.subr.bf16.mxu0 0
    %503 = vmatpush1.bf16.msra.mxu0 %v489
    %504 = vmatprep.subr.bf16.mxu0 0
    %505 = vmatpush1.bf16.msra.mxu0 %v490
    %506 = vmatprep.subr.bf16.mxu0 0
    %507 = vmatpush1.bf16.msra.mxu0 0
    %508 = vmatprep.subr.bf16.mxu0 0
    %509 = vmatpush1.bf16.msra.mxu0 0
    %510 = vmatprep.subr.bf16.mxu0 0
    %511 = vmatpush1.bf16.msra.mxu0 0
    %512 = vmatprep.subr.bf16.mxu0 0
    %513 = vmatpush1.bf16.msra.mxu0 0
    %514 = vmatprep.subr.bf16.mxu0 0
    %515 = vmatpush1.bf16.msra.mxu0 0
    %516 = vmatprep.subr.bf16.mxu0 0
    %517 = vmatpush1.bf16.msra.mxu0 0
    %518 = vmatprep.subr.bf16.mxu0 0
    %519 = vmatpush1.bf16.msra.mxu0 0
    %520 = vmatprep.subr.bf16.mxu0 0
    %521 = vmatpush1.bf16.msra.mxu0 0
    %522 = vmatprep.subr.bf16.mxu0 0
    %523 = vmatpush1.bf16.msra.mxu0 0
    %524 = vmatprep.subr.bf16.mxu0 0
    %525 = vmatpush1.bf16.msra.mxu0 0
    %526 = vmatprep.subr.bf16.mxu0 0
    %527 = vmatpush1.bf16.msra.mxu0 0
    %528 = vmatprep.subr.bf16.mxu0 0
    %529 = vmatpush1.bf16.msra.mxu0 0
    %530 = vmatprep.mubr.bf16.mxu0 0
    %531 = vmatmul.mubr.bf16.gmra.mrb[0].mxu0 %v496
    %v532 = vpop.f32.mrb[0].mxu0
    %v533 = vadd.f32 0.0, %v532
    %v534 = vpop.f32.mrb[0].mxu0
    %v535 = vpop.f32.mrb[0].mxu0
    %v536 = vadd.f32 0.0, %v535
    %v537 = vpop.f32.mrb[0].mxu0
    %538 = vdwg.mxu0
    %v539 = vld [vmem:[#allocation8] sm:$0xff]
    %v540 = vld [vmem:[#allocation8 + $0x8] sm:$0xff]
    %v541 = vadd.f32 %v533, %v539
    %v542 = vadd.f32 %v536, %v540
    %v543 = vadd.f32 %v541, %v456
    %v544 = vadd.f32 %v542, %v457
    %v545 = vmax.f32 %v543, 0.0
    %v546 = vmax.f32 %v544, 0.0
    %v547 = vpack.c.bf16 %v546, %v545
    %v549 = vunpack.c.l.b16 %v547
    %v550 = vunpack.c.h.b16 %v547
    %v551 = vpack.c.b16 %v549, %v549
    %v552 = vpack.c.b16 %v550, %v550
    %vm555 = vcmask 519168
    %556 = vst.msk [vmem:[#allocation14] sm:$0xf] %vm555, %v551
    %557 = vst.msk [vmem:[#allocation14 + $0x4] sm:$0xf] %vm555, %v552
    %v558 = vld [vmem:[#allocation13] sm:$0x1]
    %v560 = vlaneseq
    %v561 = vshrl.u32 %v560, 7
    %v562 = vsub.s32 0, %v561
    %v563 = vrot.slane %v558, %v562
    %564 = vrot.lane.b32.xlu0 %v563, 64
    %v565 = vpop.permute.xlu0 %564
    %v567 = vadd.f32 %v533, %v565
    %v568 = vadd.f32 %v536, %v565
    %vm569 = vcmask 785920
    %v570 = vsel %vm569, %v567, -inf
    %571 = vmax.xlane.f32.xlu0 %v570
    %v572 = vpop.xlane.xlu0 %571
    %v573 = vsel %vm569, %v568, -inf
    %574 = vmax.xlane.f32.xlu0 %v573
    %v575 = vpop.xlane.xlu0 %574
    %v576 = vsub.f32 %v567, %v572
    %v577 = vsub.f32 %v568, %v575
    %v578 = vmul.f32 %v576, 1.442695
    %v579 = vpow.pop %v578
    %v580 = vmul.f32 %v577, 1.442695
    %v581 = vpow.pop %v580
    %584 = vrot.lane.b32.xlu0 %v579, 64
    %v585 = vpop.permute.xlu0 %584
    %586 = vrot.lane.b32.xlu0 %v581, 64
    %v587 = vpop.permute.xlu0 %586
    %vm590 = vcmask 261120
    %v591 = vsel %vm590, %v585, 0.0
    %592 = vadd.xlane.f32.xlu0 %v591
    %v593 = vpop.xlane.xlu0 %592
    %v594 = vsel %vm590, %v587, 0.0
    %595 = vadd.xlane.f32.xlu0 %v594
    %v596 = vpop.xlane.xlu0 %595
    %v597 = vrcp.pop %v593
    %v598 = vrcp.pop %v596
    %v599 = vmul.f32 %v579, %v597
    %v600 = vmul.f32 %v581, %v598
    %603 = vrot.lane.b32.xlu0 %v599, 64
    %v604 = vpop.permute.xlu0 %603
    %605 = vrot.lane.b32.xlu0 %v600, 64
    %v606 = vpop.permute.xlu0 %605
    %609 = vst.msk [vmem:[#allocation15] sm:$0xff] %vm590, %v604
    %610 = vst.msk [vmem:[#allocation15 + $0x8] sm:$0xff] %vm590, %v606
    // Predicated region
    $region58: #{tpu_custom_call.1} parent=1 // pred_check
      _
    $region59: #{tpu_custom_call.1} parent=1 // pred_check_branch
      %612 = sbr.rel (0) target = $region61
    $region60: #{tpu_custom_call.1} parent=1 // pred_region
      %s614 = ssub.s32 128, 128
      %615 = vsyncadd [#allocation4], %s614
      %s616 = sshll.u32 [#allocation14], 4
      %s617 = int_to_ptr.vmem [resolvable:$true] %s616
      %622 = dma.vmem_to_hbm [thread:$0]  %s617, 128, %s7, [#allocation4], 64, 64, 4
    $region61: #{tpu_custom_call.1} parent=1 // pred_fallthru
      _
    // Predicated region
    $region62: #{tpu_custom_call.1} parent=1 // pred_check
      _
    $region63: #{tpu_custom_call.1} parent=1 // pred_check_branch
      %624 = sbr.rel (0) target = $region65
    $region64: #{tpu_custom_call.1} parent=1 // pred_region
      %s626 = ssub.s32 256, 256
      %627 = vsyncadd [#allocation16], %s626
      %s628 = sshll.u32 [#allocation15], 4
      %s629 = int_to_ptr.vmem [resolvable:$true] %s628
      %634 = dma.vmem_to_hbm [thread:$0]  %s629, 256, %s8, [#allocation16], 128, 128, 8
    $region65: #{tpu_custom_call.1} parent=1 // pred_fallthru
      _
    // Predicated region
    $region66: #{tpu_custom_call.1} parent=1 // pred_check
      _
    $region67: #{tpu_custom_call.1} parent=1 // pred_check_branch
      %636 = sbr.rel (0) target = $region69
    $region68: #{tpu_custom_call.1} parent=1 // pred_region
      %637 = dma.done [#allocation4], 128
    $region69: #{tpu_custom_call.1} parent=1 // pred_fallthru
      _
    // Predicated region
    $region70: #{tpu_custom_call.1} parent=1 // pred_check
      _
    $region71: #{tpu_custom_call.1} parent=1 // pred_check_branch
      %639 = sbr.rel (0) target = $region73
    $region72: #{tpu_custom_call.1} parent=1 // pred_region
      %640 = dma.done [#allocation16], 256
    $region73: #{tpu_custom_call.1} parent=1 // pred_fallthru
      _
    %641 = vsyncpa [#allocation3], 1
    %642 = vsyncpa [#allocation6], 1
    %643 = vsyncpa [#allocation9], 1
    %644 = vsyncpa [#allocation12], 1
    %645 = vsyncpa [#allocation4], 1
    %646 = vsyncpa [#allocation16], 1

</llo_original>
